<compile_context>
chip_gen: v5e
topology: v5e:2x2
jax: 0.10.0
libtpu: 0.0.40
codegen_flags: <defaults>
</compile_context>

<pallas_src>
import functools

import jax
import jax.numpy as jnp
from jax.experimental import pallas as pl
from jax.experimental.pallas import tpu as pltpu


def _gap_kernel(x_ref, o_ref, *, inv_hw):
    # x_ref: (TR, H*W) row tile; o_ref: (TR, 1)
    x = x_ref[...].astype(jnp.float32)
    s = jnp.sum(x, axis=-1, keepdims=True)          # per-row spatial sum (VPU/XLU)
    o_ref[...] = (s * inv_hw).astype(o_ref.dtype)   # constant reciprocal scale


def _round_up(v, m):
    return ((v + m - 1) // m) * m


def global_avg_pool_2d(x):
    """x: (N, C, H, W) -> (N, C, 1, 1), mean over H and W (AdaptiveAvgPool2d((1,1)))."""
    N, C, H, W = x.shape
    R = N * C
    HW = H * W

    # Free, contiguous view: each row is one (n, c) image's H*W pixels.
    x2d = x.reshape(R, HW)

    # Row-tile sizing: ~4 MiB per input buffer based on the padded VMEM footprint
    # (last dim pads to a multiple of 128 lanes in VMEM).
    itemsize = jnp.dtype(x.dtype).itemsize
    padded_row_bytes = _round_up(HW, 128) * itemsize
    target_bytes = 4 * 1024 * 1024
    tr = max(8, (target_bytes // padded_row_bytes) // 8 * 8)  # multiple of 8 sublanes
    if tr >= R:
        tr = R  # full-extent block also satisfies the (8,128) tiling rule
    grid_rows = pl.cdiv(R, tr)  # partial last block is masked on write by Pallas

    out2d = pl.pallas_call(
        functools.partial(_gap_kernel, inv_hw=1.0 / float(HW)),
        out_shape=jax.ShapeDtypeStruct((R, 1), x.dtype),
        grid_spec=pltpu.PrefetchScalarGridSpec(
            num_scalar_prefetch=0,
            grid=(grid_rows,),
            in_specs=[
                pl.BlockSpec((tr, HW), lambda r: (r, 0)),
            ],
            out_specs=pl.BlockSpec((tr, 1), lambda r: (r, 0)),
        ),
        compiler_params=pltpu.CompilerParams(
            # Rows are fully independent -> shard the row grid across TensorCores
            # (matters on v7x's 2 TCs/chip).
            dimension_semantics=("parallel",),
        ),
    )(x2d)

    return out2d.reshape(N, C, 1, 1)


if __name__ == "__main__":
    key = jax.random.PRNGKey(0)
    x = jax.random.normal(key, (2, 4, 16, 16), dtype=jnp.float32)

    out = global_avg_pool_2d(x)
    out = jax.block_until_ready(out)

    # Reference check against plain JAX (same semantics as nn.AdaptiveAvgPool2d((1,1))).
    ref = jnp.mean(x, axis=(2, 3), keepdims=True)
    assert out.shape == (2, 4, 1, 1), out.shape
    assert jnp.allclose(out, ref, atol=1e-6, rtol=1e-6), "mismatch vs reference"

    print("KERNEL_OK")
</pallas_src>

<mosaic_0001>
module attributes {stable_mosaic.version = 11 : i64} {
  func.func @_gap_kernel(%arg0: i32, %arg1: memref<8x256xf32, #tpu.memory_space<vmem>>, %arg2: memref<8x1xf32, #tpu.memory_space<vmem>>) attributes {dimension_semantics = [#tpu.dimension_semantics<parallel>], iteration_bounds = array<i64: 1>, scalar_prefetch = 0 : i64, scratch_operands = 0 : i64, tpu.core_type = #tpu.core_type<tc>, window_params = [{transform_indices = @transform_0, window_bounds = array<i64: 8, 256>}, {transform_indices = @transform_1, window_bounds = array<i64: 8, 1>}]} {
    %c0 = arith.constant 0 : index
    %c0_0 = arith.constant 0 : index
    %0 = vector.load %arg1[%c0, %c0_0] : memref<8x256xf32, #tpu.memory_space<vmem>>, vector<8x256xf32>
    %cst = arith.constant dense<0.000000e+00> : vector<8xf32>
    %1 = vector.multi_reduction <add>, %0, %cst [1] : vector<8x256xf32> to vector<8xf32>
    %2 = vector.shape_cast %1 : vector<8xf32> to vector<8x1xf32>
    %cst_1 = arith.constant 3.906250e-03 : f32
    %3 = vector.broadcast %cst_1 : f32 to vector<8x1xf32>
    %4 = arith.mulf %2, %3 : vector<8x1xf32>
    %c0_2 = arith.constant 0 : index
    %c0_3 = arith.constant 0 : index
    %5 = vector.load %arg2[%c0_2, %c0_3] : memref<8x1xf32, #tpu.memory_space<vmem>>, vector<8x1xf32>
    tpu.vector_store %arg2[%c0_2, %c0_3], %4 {strides = array<i32>} : memref<8x1xf32, #tpu.memory_space<vmem>>, vector<8x1xf32>,
    return
  }
  func.func @transform_0(%arg0: i32) -> (i32, i32) {
    %c0_i32 = arith.constant 0 : i32
    %c0_i32_0 = arith.constant 0 : i32
    return %arg0, %c0_i32 : i32, i32
  }
  func.func @transform_1(%arg0: i32) -> (i32, i32) {
    %c0_i32 = arith.constant 0 : i32
    %c0_i32_0 = arith.constant 0 : i32
    return %arg0, %c0_i32 : i32, i32
  }
}

</mosaic_0001>

<llo_original>
// kernel: tpu_custom_call.1
$region0: #{tpu_custom_call.1}
  #allocation0 [shape = 'u32[]', space=smem, size = 0x4, offset = 0x4, fixed_abs, tag = 'smem constant byte address 0x4 - core index']
  #allocation1 [shape = 'u32[72,128]{1,0:T(1,128)}', space=vmem, size = 0x9000, scoped, tag = 'internal scratch']
  %s0 = inlined_call_operand.hbm [shape: f32[8,256], index: 0, kind: input, shape index: {}]
  %s1 = inlined_call_operand.vmem [shape: f32[8,1], index: 1, kind: output, shape index: {}]
  %s2 = sld [smem:[#allocation0]]
  $region18: #{tpu_custom_call.1} parent=0
    _
  %s4 = ssub.s32 1, %s2
  %s5 = scalar_select 0, %s4, %s2
  $region1: #{tpu_custom_call.1} parent=0
    #allocation2 [shape = 'u8[8192]{0}', space=vmem, size = 0x2000, scoped, tag = 'input window, operand 0, single buffered']
    #allocation3 [shape = 's32[1]{0}', space=sflag, size = 0x4, scoped, tag = 'scoped memory for tpu_custom_call.1']
    %6 = vsyncpa [#allocation3], 0
    // Predicated region
    $region2: #{tpu_custom_call.1} parent=1 // pred_check
      _
    $region3: #{tpu_custom_call.1} parent=1 // pred_check_branch
      %8 = sbr.rel (0) target = $region5
    $region4: #{tpu_custom_call.1} parent=1 // pred_region
      %10 = vsyncadd [#allocation3], 0
      %s12 = sshll.u32 %s0, 4
      %s13 = int_to_ptr.hbm [resolvable:$true] %s12
      %s14 = sshll.u32 [#allocation2], 4
      %s15 = int_to_ptr.vmem [resolvable:$true] %s14
      %17 = dma.hbm_to_vmem [thread:$0]  %s13, 256, %s15, [#allocation3]
    $region5: #{tpu_custom_call.1} parent=1 // pred_fallthru
      _
    // Predicated region
    $region6: #{tpu_custom_call.1} parent=1 // pred_check
      _
    $region7: #{tpu_custom_call.1} parent=1 // pred_check_branch
      %19 = sbr.rel (0) target = $region9
    $region8: #{tpu_custom_call.1} parent=1 // pred_region
      %21 = dma.done [#allocation3], 256
    $region9: #{tpu_custom_call.1} parent=1 // pred_fallthru
      _
    %v22 = vld [vmem:[#allocation2] sm:$0xff]
    %v23 = vld [vmem:[#allocation2 + $0x8] sm:$0xff]
    %v24 = vadd.f32 %v22, %v23
    %25 = vadd.xlane.f32.xlu0 %v24
    %v26 = vpop.xlane.xlu0 %25
    %v27 = vmul.f32 %v26, 0.00390625
    %vm28 = vcmask 7168
    %29 = vst.msk [vmem:[%s1] sm:$0xff] %vm28, %v27
    // Predicated region
    $region10: #{tpu_custom_call.1} parent=1 // pred_check
      _
    $region11: #{tpu_custom_call.1} parent=1 // pred_check_branch
      %31 = sbr.rel (0) target = $region13
    $region12: #{tpu_custom_call.1} parent=1 // pred_region
      _
    $region13: #{tpu_custom_call.1} parent=1 // pred_fallthru
      _
    // Predicated region
    $region14: #{tpu_custom_call.1} parent=1 // pred_check
      _
    $region15: #{tpu_custom_call.1} parent=1 // pred_check_branch
      %33 = sbr.rel (0) target = $region17
    $region16: #{tpu_custom_call.1} parent=1 // pred_region
      _
    $region17: #{tpu_custom_call.1} parent=1 // pred_fallthru
      _
    %34 = vsyncpa [#allocation3], 1

</llo_original>
